<compile_context>
chip_gen: v7x
topology: tpu7x:2x2x1
jax: 0.10.0
libtpu: 0.0.40
codegen_flags: <defaults>
</compile_context>

<pallas_src>
import functools
import math

import numpy as np
import jax
import jax.numpy as jnp
from jax.experimental import pallas as pl
from jax.experimental.pallas import tpu as pltpu


_TAP_OFFSETS = tuple((dy, dx) for dy in (-1, 0, 1) for dx in (-1, 0, 1))
RGB_MEAN = jnp.array([0.4488, 0.4371, 0.404], jnp.float32)   # rgb_std == 1.0


def _round_up(x, m):
    return ((x + m - 1) // m) * m


# ----------------------------------------------------------------------------
# Roll-direction probe: pltpu.roll is expected to match np.roll semantics
# (result[i] = x[i - shift]); probed once, eagerly, so the static shifts baked
# into the kernels are correct regardless of convention.  Warmed outside any
# jit trace (in init_hrn_params / __main__).
# ----------------------------------------------------------------------------
@functools.lru_cache(maxsize=None)
def _roll_matches_np():
    def k(x_ref, o_ref):
        o_ref[...] = pltpu.roll(x_ref[...], 1, axis=1)
    x = jnp.arange(8 * 128, dtype=jnp.float32).reshape(8, 128)
    y = pl.pallas_call(k, out_shape=jax.ShapeDtypeStruct((8, 128), jnp.float32))(x)
    return bool(y[0, 1] == x[0, 0])


def _shift_amount(s, P):
    """Static roll amount so that rolled[p] == x[(p + s) % P]."""
    return (-s) % P if _roll_matches_np() else s % P


# ----------------------------------------------------------------------------
# Host-side boundary masks: (9, P) f32, 1.0 where the tap's neighbour lies
# inside the image (emulates zero padding after the lane roll).
# ----------------------------------------------------------------------------
@functools.lru_cache(maxsize=None)
def _make_masks(H, W):
    P = H * W
    pos = np.arange(P)
    row, col = pos // W, pos % W
    ms = []
    for dy, dx in _TAP_OFFSETS:
        ok = ((row + dy >= 0) & (row + dy < H) &
              (col + dx >= 0) & (col + dx < W))
        ms.append(ok.astype(np.float32))
    return np.stack(ms, axis=0)


# ----------------------------------------------------------------------------
# In-kernel helper: stream the 9 rolled+masked taps of x (C, P) f32 into the
# bf16 staging ref (9*C, P).  Only one tap is live at a time; the single fused
# MXU dot that follows sees contraction depth K = 9*C.
# ----------------------------------------------------------------------------
def _stage_taps(tap_ref, x, masks, W, P, C):
    for t, (dy, dx) in enumerate(_TAP_OFFSETS):
        if dy == 0 and dx == 0:
            tap = x
        else:
            s = dy * W + dx
            tap = pltpu.roll(x, _shift_amount(s, P), axis=1) * masks[t:t + 1, :]
        tap_ref[t * C:(t + 1) * C, :] = tap.astype(jnp.bfloat16)


# ----------------------------------------------------------------------------
# Pallas kernels
# ----------------------------------------------------------------------------
def _conv3x3_kernel(*refs, H, W, relu, has_res):
    """Single fused 3x3 conv on a (Cin, H*W) tile: one K=9*Cin bf16 MXU dot,
    f32 bias / ReLU / residual epilogue.

    refs: mask (9,P), x (1,Cin,P), w (Cout,9*Cin) bf16, b (Cout,1),
          [res (1,Cout,P)], out (1,Cout,P), tap scratch (9*Cin,P) bf16
    """
    if has_res:
        mask_ref, x_ref, w_ref, b_ref, r_ref, o_ref, tap_ref = refs
    else:
        mask_ref, x_ref, w_ref, b_ref, o_ref, tap_ref = refs
        r_ref = None
    P = H * W
    Cin = x_ref.shape[1]
    masks = mask_ref[...]
    _stage_taps(tap_ref, x_ref[0], masks, W, P, Cin)
    y = jnp.dot(w_ref[...], tap_ref[...],
                preferred_element_type=jnp.float32) + b_ref[...]
    if relu:
        y = jnp.maximum(y, 0.0)
    if has_res:
        y = y + r_ref[0]
    o_ref[0] = y


def _body_kernel(mask_ref, x_ref, w1_ref, b1_ref, wc_ref, bc_ref, w3_ref, b3_ref,
                 o_ref, tap_ref, gin_ref, *, H, W, card, wp):
    """One HSARB block per grid step; grid = (N, groups, blocks).

    The (F, P) activation stays resident in the output VMEM block across the
    two "arbitrary" axes; per-block weights stream in through the BlockSpec
    pipeline.  gin_ref (scratch) keeps the ResidualGroup input for the fused
    group tail (res*0.1 + group_in).
    """
    g, b = pl.program_id(1), pl.program_id(2)
    P = H * W

    @pl.when((g == 0) & (b == 0))
    def _():                                     # load the body input once per image
        o_ref[0] = x_ref[0]

    cur = o_ref[0]                               # (F, P) f32, resident activation

    @pl.when(b == 0)
    def _():                                     # stash the group input
        gin_ref[...] = cur

    masks = mask_ref[...]

    # 1x1 conv: single MXU dot, K = F
    spx = jnp.dot(w1_ref[0], cur.astype(jnp.bfloat16),
                  preferred_element_type=jnp.float32) + b1_ref[0]   # (card*wp, P)

    acc3 = None
    sp = None
    for k in range(card):                        # chained branches (sequential dep)
        spx_k = spx[k * wp:(k + 1) * wp, :]
        v = spx_k if k == 0 else sp + spx_k
        _stage_taps(tap_ref, v, masks, W, P, wp)           # branch conv, K = 9*wp
        sp = jnp.maximum(
            jnp.dot(wc_ref[0, k], tap_ref[...],
                    preferred_element_type=jnp.float32) + bc_ref[0, k], 0.0)
        _stage_taps(tap_ref, sp, masks, W, P, wp)          # conv3 distributed over
        c3 = jnp.dot(w3_ref[0, k], tap_ref[...],           # the channel concat
                     preferred_element_type=jnp.float32)
        acc3 = c3 if k == 0 else acc3 + c3

    y = (acc3 + b3_ref[0]) * 0.1 + cur           # HSARB residual
    o_ref[0] = y

    @pl.when(b == pl.num_programs(2) - 1)        # fused ResidualGroup tail
    def _():
        o_ref[0] = y * 0.1 + gin_ref[...]


# ----------------------------------------------------------------------------
# Pallas wrappers
# ----------------------------------------------------------------------------
def conv3x3(x, w, b, masks, *, H, W, relu=False, residual=None):
    """x: (N,Cin,H*W), w: (Cout,9*Cin) bf16, b: (Cout,1) -> (N,Cout,H*W)."""
    N, Cin, P = x.shape
    Cout = w.shape[0]
    assert P == H * W and w.shape[1] == 9 * Cin
    has_res = residual is not None
    kernel = functools.partial(_conv3x3_kernel, H=H, W=W, relu=relu,
                               has_res=has_res)
    in_specs = [
        pl.BlockSpec((9, P), lambda n: (0, 0)),
        pl.BlockSpec((1, Cin, P), lambda n: (n, 0, 0)),
        pl.BlockSpec((Cout, 9 * Cin), lambda n: (0, 0)),
        pl.BlockSpec((Cout, 1), lambda n: (0, 0)),
    ]
    args = [masks, x, w, b]
    if has_res:
        in_specs.append(pl.BlockSpec((1, Cout, P), lambda n: (n, 0, 0)))
        args.append(residual)
    return pl.pallas_call(
        kernel,
        out_shape=jax.ShapeDtypeStruct((N, Cout, P), jnp.float32),
        grid=(N,),
        in_specs=in_specs,
        out_specs=pl.BlockSpec((1, Cout, P), lambda n: (n, 0, 0)),
        scratch_shapes=[pltpu.VMEM((9 * Cin, P), jnp.bfloat16)],
        compiler_params=pltpu.CompilerParams(
            dimension_semantics=("parallel",)),
    )(*args)


def hsarb_body(x, body, masks, *, H, W, card, wp, n_groups, n_blocks):
    """All HSARB blocks of all ResidualGroups fused into one pallas_call.
    x: (N, F, H*W) -> (N, F, H*W)."""
    N, F, P = x.shape
    assert P == H * W
    w1, b1, wc, bc, w3, b3 = body
    c4p = card * wp
    kernel = functools.partial(_body_kernel, H=H, W=W, card=card, wp=wp)

    def wmap3(n, g, b):
        return (g * n_blocks + b, 0, 0)

    def wmap4(n, g, b):
        return (g * n_blocks + b, 0, 0, 0)

    return pl.pallas_call(
        kernel,
        out_shape=jax.ShapeDtypeStruct((N, F, P), jnp.float32),
        grid=(N, n_groups, n_blocks),
        in_specs=[
            pl.BlockSpec((9, P), lambda n, g, b: (0, 0)),
            pl.BlockSpec((1, F, P), lambda n, g, b: (n, 0, 0)),
            pl.BlockSpec((1, c4p, F), wmap3),
            pl.BlockSpec((1, c4p, 1), wmap3),
            pl.BlockSpec((1, card, wp, 9 * wp), wmap4),
            pl.BlockSpec((1, card, wp, 1), wmap4),
            pl.BlockSpec((1, card, F, 9 * wp), wmap4),
            pl.BlockSpec((1, F, 1), wmap3),
        ],
        out_specs=pl.BlockSpec((1, F, P), lambda n, g, b: (n, 0, 0)),
        scratch_shapes=[pltpu.VMEM((9 * wp, P), jnp.bfloat16),
                        pltpu.VMEM((F, P), jnp.float32)],
        compiler_params=pltpu.CompilerParams(
            dimension_semantics=("parallel", "arbitrary", "arbitrary")),
    )(masks, x, w1, b1, wc, bc, w3, b3)


# ----------------------------------------------------------------------------
# Plain-JAX glue: pixel shuffle, parameter init, model assembly
# ----------------------------------------------------------------------------
def pixel_shuffle_flat(x, H, W, r):
    """(N, C*r*r, H*W) -> (N, C, (H*r)*(W*r)), matching torch.nn.PixelShuffle."""
    N, Crr, _ = x.shape
    C = Crr // (r * r)
    x = x.reshape(N, C, r, r, H, W)
    x = jnp.transpose(x, (0, 1, 4, 2, 5, 3))      # N, C, H, i, W, j
    return x.reshape(N, C, H * r * W * r)


def _uniform(key, shape, bound):
    return jax.random.uniform(key, shape, jnp.float32, -bound, bound)


def _pack9(w9):
    """(9, Cout, Cin) -> (Cout, 9*Cin) bf16, row order t*Cin+i matching
    _stage_taps (a torch OIHW checkpoint maps as w9[ky*3+kx,o,i]=w[o,i,ky,kx])."""
    cout = w9.shape[1]
    return jnp.transpose(w9, (1, 0, 2)).reshape(cout, -1).astype(jnp.bfloat16)


def _conv3x3_packed(key, cin, cout, cin_pad=None):
    """PyTorch Conv2d default init, packed + bf16; optional zero-padded Cin."""
    cin_pad = cin if cin_pad is None else cin_pad
    wk, bk = jax.random.split(key)
    bound = 1.0 / math.sqrt(cin * 9)
    w9 = _uniform(wk, (9, cout, cin), bound)
    if cin_pad > cin:
        w9 = jnp.pad(w9, ((0, 0), (0, 0), (0, cin_pad - cin)))
    b = _uniform(bk, (cout, 1), bound)
    return _pack9(w9), b


def _hsarb_params(key, F, width, wp, card):
    """One HSARB block's weights, packed for the fused body kernel (width
    zero-padded to wp so all staging slices are sublane-aligned -- exact)."""
    k1, k2, k3, k4, kc = jax.random.split(key, 5)
    # conv1 (1x1): per-branch rows padded width -> wp
    bound1 = 1.0 / math.sqrt(F)
    w1 = jnp.pad(_uniform(k1, (card, width, F), bound1),
                 ((0, 0), (0, wp - width), (0, 0)))
    b1 = jnp.pad(_uniform(k2, (card, width, 1), bound1),
                 ((0, 0), (0, wp - width), (0, 0)))
    w1 = w1.reshape(card * wp, F).astype(jnp.bfloat16)
    b1 = b1.reshape(card * wp, 1)
    # per-branch 3x3 convs (width -> width)
    boundc = 1.0 / math.sqrt(width * 9)
    wc_l, bc_l = [], []
    for bkey in jax.random.split(kc, card):
        kw, kb = jax.random.split(bkey)
        w9 = jnp.pad(_uniform(kw, (9, width, width), boundc),
                     ((0, 0), (0, wp - width), (0, wp - width)))
        wc_l.append(_pack9(w9))                                   # (wp, 9*wp)
        bc_l.append(jnp.pad(_uniform(kb, (width, 1), boundc),
                            ((0, wp - width), (0, 0))))
    wc = jnp.stack(wc_l, 0)                                       # (card, wp, 9*wp)
    bc = jnp.stack(bc_l, 0)                                       # (card, wp, 1)
    # conv3 (card*width -> F), split per branch for the distributed concat
    bound3 = 1.0 / math.sqrt(width * card * 9)
    w9 = _uniform(k3, (9, F, width * card), bound3)
    b3 = _uniform(k4, (F, 1), bound3)
    w3_l = []
    for k in range(card):
        w9k = jnp.pad(w9[:, :, k * width:(k + 1) * width],
                      ((0, 0), (0, 0), (0, wp - width)))
        w3_l.append(_pack9(w9k))                                  # (F, 9*wp)
    w3 = jnp.stack(w3_l, 0)                                       # (card, F, 9*wp)
    return w1, b1, wc, bc, w3, b3


def init_hrn_params(key, *, n_colors, n_feats, n_resgroups, n_resblocks,
                    cardinality, lowd, up_scale):
    _roll_matches_np()                        # warm the roll probe outside jit
    F = n_feats
    width = int(math.floor(n_feats * (lowd / 64.0)))
    wp = _round_up(max(width, 1), 8)
    cin_p = _round_up(n_colors, 8)
    GB = n_resgroups * n_resblocks
    n_up = int(round(math.log2(up_scale)))
    assert up_scale == 2 ** n_up, "only power-of-2 upsampling supported"
    keys = list(jax.random.split(key, GB + n_up + 3))

    params = {}
    params['head'] = _conv3x3_packed(keys[0], n_colors, F, cin_pad=cin_p)
    blocks = [_hsarb_params(keys[1 + i], F, width, wp, cardinality)
              for i in range(GB)]
    params['body'] = tuple(jnp.stack([blk[i] for blk in blocks], axis=0)
                           for i in range(6))
    params['body_conv'] = _conv3x3_packed(keys[1 + GB], F, F)
    params['tail_up'] = [_conv3x3_packed(keys[2 + GB + i], F, 4 * F)
                         for i in range(n_up)]
    params['tail_conv'] = _conv3x3_packed(keys[2 + GB + n_up], F, n_colors)

    cfg = dict(n_resgroups=n_resgroups, n_resblocks=n_resblocks,
               cardinality=cardinality, wp=wp, cin_p=cin_p, width=width)
    return params, cfg


def hrn_forward(x_nchw, params, *, cfg, rgb_range=1.0):
    card, wp = cfg['cardinality'], cfg['wp']
    n_groups, n_blocks = cfg['n_resgroups'], cfg['n_resblocks']
    cin_p = cfg['cin_p']
    N, C, H, W = x_nchw.shape
    P = H * W

    x = x_nchw.astype(jnp.float32).reshape(N, C, P)              # flat layout
    x = x - rgb_range * RGB_MEAN[None, :, None]                  # sub_mean (std==1)
    if cin_p > C:                                                # pad colors -> 8
        x = jnp.concatenate(
            [x, jnp.zeros((N, cin_p - C, P), jnp.float32)], axis=1)

    masks = _make_masks(H, W)
    hw_, hb_ = params['head']
    x = conv3x3(x, hw_, hb_, masks, H=H, W=W)                    # head conv

    res = hsarb_body(x, params['body'], masks, H=H, W=W, card=card, wp=wp,
                     n_groups=n_groups, n_blocks=n_blocks)       # fused body
    bw_, bb_ = params['body_conv']
    res = conv3x3(res, bw_, bb_, masks, H=H, W=W, residual=x)    # body conv + skip

    y = res
    ph, pw = H, W
    for (uw_, ub_) in params['tail_up']:                         # Upsampler stages
        y = conv3x3(y, uw_, ub_, _make_masks(ph, pw), H=ph, W=pw)
        # TODO(synk): fuse the pixel shuffle into the conv's output store
        # (strided lane writes) to avoid this XLA relayout of the largest
        # activation in the network.
        y = pixel_shuffle_flat(y, ph, pw, 2)
        ph, pw = ph * 2, pw * 2
    tw_, tb_ = params['tail_conv']
    # add_mean folded into the tail-conv bias (rgb_std == 1)
    y = conv3x3(y, tw_, tb_ + rgb_range * RGB_MEAN[:, None],
                _make_masks(ph, pw), H=ph, W=pw)

    return y.reshape(N, -1, ph, pw)                              # back to NCHW


# ----------------------------------------------------------------------------
if __name__ == "__main__":
    # Small synthetic config: n_resgroups=2, n_resblocks=2, n_feats=8,
    # n_colors=3, cardinality=4, lowd=32, scale=[2], rgb_range=1.0
    n_colors, n_feats = 3, 8
    n_resgroups, n_resblocks = 2, 2
    cardinality, lowd = 4, 32
    up_scale = 2
    rgb_range = 1.0

    _roll_matches_np()   # warm the roll-direction probe outside any trace

    key = jax.random.PRNGKey(0)
    pkey, xkey = jax.random.split(key)
    params, cfg = init_hrn_params(pkey, n_colors=n_colors, n_feats=n_feats,
                                  n_resgroups=n_resgroups,
                                  n_resblocks=n_resblocks,
                                  cardinality=cardinality, lowd=lowd,
                                  up_scale=up_scale)

    x = jax.random.uniform(xkey, (2, n_colors, 16, 16), jnp.float32)  # NCHW

    fwd = jax.jit(functools.partial(hrn_forward, cfg=cfg, rgb_range=rgb_range))
    y = fwd(x, params)
    jax.block_until_ready(y)
    assert y.shape == (2, n_colors, 16 * up_scale, 16 * up_scale), y.shape
    assert y.dtype == jnp.float32
    print("KERNEL_OK")
</pallas_src>

<mosaic_0001>
module attributes {stable_mosaic.version = 11 : i64} {
  func.func @k(%arg0: memref<8x128xf32, #tpu.memory_space<vmem>>, %arg1: memref<8x128xf32, #tpu.memory_space<vmem>>) attributes {dimension_semantics = [], scalar_prefetch = 0 : i64, scratch_operands = 0 : i64, tpu.core_type = #tpu.core_type<tc>} {
    %c0 = arith.constant 0 : index
    %c0_0 = arith.constant 0 : index
    %0 = vector.load %arg0[%c0, %c0_0] : memref<8x128xf32, #tpu.memory_space<vmem>>, vector<8x128xf32>
    %c1_i32 = arith.constant 1 : i32
    %1 = tpu.dynamic_rotate %0 by %c1_i32 dim 1 : vector<8x128xf32>, i32 -> vector<8x128xf32>
    %c0_1 = arith.constant 0 : index
    %c0_2 = arith.constant 0 : index
    %2 = vector.load %arg1[%c0_1, %c0_2] : memref<8x128xf32, #tpu.memory_space<vmem>>, vector<8x128xf32>
    tpu.vector_store %arg1[%c0_1, %c0_2], %1 {strides = array<i32>} : memref<8x128xf32, #tpu.memory_space<vmem>>, vector<8x128xf32>,
    return
  }
}

</mosaic_0001>

<llo_original>
// kernel: tpu_custom_call.1
$region0: #{tpu_custom_call.1}
  #allocation0 [shape = 'u32[]', space=smem, size = 0x4, offset = 0x4, fixed_abs, tag = 'smem constant byte address 0x4 - core index']
  #allocation1 [shape = 'u32[144,128]{1,0:T(1,128)}', space=vmem, size = 0x12000, scoped, tag = 'internal scratch']
  %s0 = inlined_call_operand.hbm [shape: f32[8,128], index: 0, kind: input, shape index: {}]
  %s1 = inlined_call_operand.hbm [shape: f32[8,128], index: 1, kind: output, shape index: {}]
  %s2 = sld [smem:[#allocation0]]
  $region18: #{tpu_custom_call.1} parent=0
    _
  %s4 = ssub.s32 1, %s2
  %s5 = scalar_select 0, %s4, %s2
  $region1: #{tpu_custom_call.1} parent=0
    #allocation2 [shape = 'u8[4096]{0}', space=vmem, size = 0x1000, scoped, tag = 'input window, operand 0, single buffered']
    #allocation3 [shape = 's32[1]{0}', space=sflag, size = 0x4, scoped, tag = 'scoped memory for tpu_custom_call.1']
    #allocation4 [shape = 's32[1]{0}', space=sflag, size = 0x4, scoped, tag = 'scoped memory for tpu_custom_call.1']
    #allocation5 [shape = 'u8[4096]{0}', space=vmem, size = 0x1000, scoped, tag = 'output window, operand 0, single buffered']
    %6 = vsyncpa [#allocation3], 0
    %7 = vsyncpa [#allocation4], 0
    // Predicated region
    $region2: #{tpu_custom_call.1} parent=1 // pred_check
      _
    $region3: #{tpu_custom_call.1} parent=1 // pred_check_branch
      %9 = sbr.rel (0) target = $region5
    $region4: #{tpu_custom_call.1} parent=1 // pred_region
      %s11 = ssub.s32 128, 128
      %12 = vsyncadd [#allocation3], %s11
      %s14 = sshll.u32 [#allocation2], 4
      %s15 = int_to_ptr.vmem [resolvable:$true] %s14
      %17 = dma.hbm_to_vmem [thread:$0]  %s0, 128, %s15, [#allocation3]
    $region5: #{tpu_custom_call.1} parent=1 // pred_fallthru
      _
    // Predicated region
    $region6: #{tpu_custom_call.1} parent=1 // pred_check
      _
    $region7: #{tpu_custom_call.1} parent=1 // pred_check_branch
      %19 = sbr.rel (0) target = $region9
    $region8: #{tpu_custom_call.1} parent=1 // pred_region
      %20 = dma.done [#allocation3], 128
    $region9: #{tpu_custom_call.1} parent=1 // pred_fallthru
      _
    %v21 = vld [vmem:[#allocation2] sm:$0xff]
    %22 = vrot.lane.b32.xlu0 %v21, 1
    %v23 = vpop.permute.xlu0 %22
    %24 = vst [vmem:[#allocation5] sm:$0xff] %v23
    // Predicated region
    $region10: #{tpu_custom_call.1} parent=1 // pred_check
      _
    $region11: #{tpu_custom_call.1} parent=1 // pred_check_branch
      %26 = sbr.rel (0) target = $region13
    $region12: #{tpu_custom_call.1} parent=1 // pred_region
      %s28 = ssub.s32 128, 128
      %29 = vsyncadd [#allocation4], %s28
      %s31 = sshll.u32 [#allocation5], 4
      %s32 = int_to_ptr.vmem [resolvable:$true] %s31
      %34 = dma.vmem_to_hbm [thread:$0]  %s32, 128, %s1, [#allocation4]
    $region13: #{tpu_custom_call.1} parent=1 // pred_fallthru
      _
    // Predicated region
    $region14: #{tpu_custom_call.1} parent=1 // pred_check
      _
    $region15: #{tpu_custom_call.1} parent=1 // pred_check_branch
      %36 = sbr.rel (0) target = $region17
    $region16: #{tpu_custom_call.1} parent=1 // pred_region
      %37 = dma.done [#allocation4], 128
    $region17: #{tpu_custom_call.1} parent=1 // pred_fallthru
      _
    %38 = vsyncpa [#allocation3], 1
    %39 = vsyncpa [#allocation4], 1

</llo_original>
